<compile_context>
chip_gen: v7x
topology: tpu7x:2x2x1
jax: 0.10.0
libtpu: 0.0.40
codegen_flags: <defaults>
</compile_context>

<pallas_src>
import jax
import jax.numpy as jnp
from jax import lax
from jax.experimental import pallas as pl
from jax.experimental.pallas import tpu as pltpu


def _gram_kernel(wl_ref, wr_ref, gram_ref):
    """One (i, j, k) tile of W @ W.T, accumulating directly into the output.

    wl_ref  : (TM, TK) row block i of W (LHS)
    wr_ref  : (TN, TK) row block j of W (RHS)
    gram_ref: (TM, TN) f32 output block, resident across the k axis.
    """
    k = pl.program_id(2)

    @pl.when(k == 0)
    def _init():
        gram_ref[...] = jnp.zeros_like(gram_ref)

    # Contract the last axis of both operands (A @ B.T) directly on the MXU:
    # no transposed copy of W is materialized in VMEM.
    gram_ref[...] += lax.dot_general(
        wl_ref[...],
        wr_ref[...],
        dimension_numbers=(((1,), (1,)), ((), ())),
        preferred_element_type=jnp.float32,
    )


def _round_up(x, m):
    return ((x + m - 1) // m) * m


def _vmem_capacity_bytes():
    try:
        return int(pltpu.get_tpu_info().vmem_capacity_bytes)
    except Exception:
        return 64 << 20  # conservative (v7x-sized) fallback


def _pick_tile(dim, cap, min_blocks=1):
    """Largest 128-aligned tile <= cap minimizing padding, with >= min_blocks."""
    best, best_cost = 128, None
    for t in range(128, cap + 1, 128):
        padded = _round_up(dim, t)
        if padded // t < min_blocks:
            continue
        cost = (padded - dim, -t)  # minimize padding, prefer bigger tile
        if best_cost is None or cost < best_cost:
            best, best_cost = t, cost
    return best


def gram_matrix(w):
    """W @ W.T via a tiled Pallas kernel (f32 accumulation)."""
    m, n = w.shape

    # Tiny-case bypass: grid would be (1,1,1), output lane dim < 128 forces
    # masked partial stores and launch overhead exceeds the compute.
    if m < 128 or (m * n * 4) < (1 << 20):
        wf = w.astype(jnp.float32)
        return wf @ wf.T

    vmem_bytes = _vmem_capacity_bytes()
    big_vmem = vmem_bytes >= (100 << 20)         # v5e/v6e: 128 MiB; v7x: 64 MiB
    cap = 1024 if big_vmem else 512

    # >= 2 blocks along each parallel axis once M > 128 (v7x megacore).
    tm = _pick_tile(m, cap, min_blocks=2 if m > 128 else 1)
    tn = tm
    tk = _pick_tile(n, cap, min_blocks=1)

    m_pad = _round_up(m, tm)
    n_pad = _round_up(n, tk)
    if m_pad != m or n_pad != n:
        # Zero padding contributes nothing to W @ W.T; padded Gram rows/cols
        # are sliced off below.
        w = jnp.pad(w, ((0, m_pad - m), (0, n_pad - n)))

    gi, gj, gk = m_pad // tm, m_pad // tn, n_pad // tk
    bytes_per_elem = w.dtype.itemsize

    cost = pl.CostEstimate(
        flops=2 * m_pad * m_pad * n_pad,
        transcendentals=0,
        # LHS slab re-fetched once per j block, RHS slab once per i block.
        bytes_accessed=(gj + gi) * m_pad * n_pad * bytes_per_elem
        + m_pad * m_pad * 4,
    )

    # 128-MiB chips: generous limit for the bigger tiles. 64-MiB chips: stay
    # well under physical VMEM, leaving headroom for Mosaic internal scratch.
    vmem_limit = (96 << 20) if big_vmem else (40 << 20)

    gram = pl.pallas_call(
        _gram_kernel,
        out_shape=jax.ShapeDtypeStruct((m_pad, m_pad), jnp.float32),
        grid_spec=pltpu.PrefetchScalarGridSpec(
            num_scalar_prefetch=0,
            grid=(gi, gj, gk),
            in_specs=[
                pl.BlockSpec((tm, tk), lambda i, j, k: (i, k)),  # LHS rows
                pl.BlockSpec((tn, tk), lambda i, j, k: (j, k)),  # RHS rows
            ],
            out_specs=pl.BlockSpec((tm, tn), lambda i, j, k: (i, j)),
        ),
        compiler_params=pltpu.CompilerParams(
            dimension_semantics=("parallel", "parallel", "arbitrary"),
            vmem_limit_bytes=vmem_limit,
        ),
        cost_estimate=cost,
    )(w, w)

    if m_pad != m:
        gram = gram[:m, :m]
    return gram


def sv_regularization(linear_weights, use_bf16_matmul=False):
    """JAX/Pallas equivalent of SV_regularization.forward.

    Returns (ratio, entropy, norm) as float32 scalars.
    """
    w = linear_weights.astype(jnp.float32)
    w_mm = w.astype(jnp.bfloat16) if use_bf16_matmul else w

    # Pallas (MXU): Gram matrix A = W @ W.T (f32 accumulation / output).
    gram = gram_matrix(w_mm)

    # Per-row L2 norms come for free from the Gram diagonal
    # (diag(W @ W.T)_i == sum_j W_ij^2) -- no separate reduction kernel.
    norm = jnp.mean(jnp.sqrt(jnp.maximum(jnp.diagonal(gram), 0.0)))

    # TODO(synk): the eigendecomposition of the small (M, M) Gram matrix has
    # no clean Pallas equivalent; it stays in XLA.  Gram is symmetric PSD, so
    # its eigenvalues equal the singular values torch.svd would return; clamp
    # tiny negatives and reverse to descending order to match torch.svd.
    s = jnp.maximum(jnp.linalg.eigvalsh(gram)[::-1], 0.0)

    ratio = s[0] / (s[-1] + 1e-5)

    # Tiny O(M) entropy epilogue: cheaper in plain XLA than an extra Pallas
    # launch (negative entropy, matching the PyTorch reference as written).
    x = jnp.sqrt(s)
    entropy = jnp.sum(jax.nn.softmax(x) * jax.nn.log_softmax(x))

    return ratio, entropy, norm


if __name__ == "__main__":
    key = jax.random.PRNGKey(0)
    # nn.Linear(in_features=1536, out_features=256) weight: big enough to
    # exercise the tiled Pallas path (multiple i/j blocks and >1 k step),
    # still small overall.
    M, N = 256, 1536
    linear_weights = jax.random.normal(key, (M, N), dtype=jnp.float32)

    # Direct check of the Pallas Gram kernel against XLA.
    gram = gram_matrix(linear_weights)
    jax.block_until_ready(gram)
    gram_ref = linear_weights @ linear_weights.T
    assert gram.shape == (M, M)
    assert jnp.allclose(gram, gram_ref, rtol=1e-4, atol=1e-2)

    # End-to-end forward pass.
    ratio, entropy, norm = sv_regularization(linear_weights)
    jax.block_until_ready((ratio, entropy, norm))

    # Pure-JAX reference with the exact torch.svd-based semantics.
    s_ref = jnp.linalg.svd(gram_ref, compute_uv=False)
    ratio_ref = s_ref[0] / (s_ref[-1] + 1e-5)
    x_ref = jnp.sqrt(s_ref)
    ent_ref = jnp.sum(jax.nn.softmax(x_ref) * jax.nn.log_softmax(x_ref))
    norm_ref = jnp.mean(jnp.linalg.norm(linear_weights, axis=1))

    assert jnp.allclose(ratio, ratio_ref, rtol=5e-3, atol=1e-3)
    assert jnp.allclose(entropy, ent_ref, rtol=1e-3, atol=1e-3)
    assert jnp.allclose(norm, norm_ref, rtol=1e-4, atol=1e-3)

    print("KERNEL_OK")
</pallas_src>

<mosaic_0001>
module attributes {stable_mosaic.version = 11 : i64} {
  func.func @_gram_kernel(%arg0: i32, %arg1: i32, %arg2: i32, %arg3: memref<128x512xf32, #tpu.memory_space<vmem>>, %arg4: memref<128x512xf32, #tpu.memory_space<vmem>>, %arg5: memref<128x128xf32, #tpu.memory_space<vmem>>) attributes {dimension_semantics = [#tpu.dimension_semantics<parallel>, #tpu.dimension_semantics<parallel>, #tpu.dimension_semantics<arbitrary>], iteration_bounds = array<i64: 2, 2, 3>, scalar_prefetch = 0 : i64, scratch_operands = 0 : i64, tpu.core_type = #tpu.core_type<tc>, window_params = [{transform_indices = @transform_0, window_bounds = array<i64: 128, 512>}, {transform_indices = @transform_1, window_bounds = array<i64: 128, 512>}, {transform_indices = @transform_2, window_bounds = array<i64: 128, 128>}]} {
    %c0_i32 = arith.constant 0 : i32
    %0 = arith.cmpi eq, %arg2, %c0_i32 : i32
    %1 = arith.extui %0 : i1 to i32
    %c0_i32_0 = arith.constant 0 : i32
    %2 = arith.cmpi ne, %1, %c0_i32_0 : i32
    scf.if %2 {
      %cst_8 = arith.constant 0.000000e+00 : f32
      %9 = vector.broadcast %cst_8 : f32 to vector<128x128xf32>
      %c0_9 = arith.constant 0 : index
      %c0_10 = arith.constant 0 : index
      %10 = vector.load %arg5[%c0_9, %c0_10] : memref<128x128xf32, #tpu.memory_space<vmem>>, vector<128x128xf32>
      tpu.vector_store %arg5[%c0_9, %c0_10], %9 {strides = array<i32>} : memref<128x128xf32, #tpu.memory_space<vmem>>, vector<128x128xf32>,
    } else {
    }
    %c0 = arith.constant 0 : index
    %c0_1 = arith.constant 0 : index
    %3 = vector.load %arg5[%c0, %c0_1] : memref<128x128xf32, #tpu.memory_space<vmem>>, vector<128x128xf32>
    %c0_2 = arith.constant 0 : index
    %c0_3 = arith.constant 0 : index
    %4 = vector.load %arg3[%c0_2, %c0_3] : memref<128x512xf32, #tpu.memory_space<vmem>>, vector<128x512xf32>
    %c0_4 = arith.constant 0 : index
    %c0_5 = arith.constant 0 : index
    %5 = vector.load %arg4[%c0_4, %c0_5] : memref<128x512xf32, #tpu.memory_space<vmem>>, vector<128x512xf32>
    %cst = arith.constant dense<0.000000e+00> : vector<128x128xf32>
    %6 = tpu.matmul %4, %5, %cst {dimension_numbers = #tpu.dot_dimension_numbers<[1], [1], [0], [0], [0, 0, 1, 0], [], []>} : vector<128x512xf32>, vector<128x512xf32>, vector<128x128xf32> -> vector<128x128xf32>
    %7 = arith.addf %3, %6 : vector<128x128xf32>
    %c0_6 = arith.constant 0 : index
    %c0_7 = arith.constant 0 : index
    %8 = vector.load %arg5[%c0_6, %c0_7] : memref<128x128xf32, #tpu.memory_space<vmem>>, vector<128x128xf32>
    tpu.vector_store %arg5[%c0_6, %c0_7], %7 {strides = array<i32>} : memref<128x128xf32, #tpu.memory_space<vmem>>, vector<128x128xf32>,
    return
  }
  func.func @transform_0(%arg0: i32, %arg1: i32, %arg2: i32) -> (i32, i32) {
    %c0_i32 = arith.constant 0 : i32
    return %arg0, %arg2 : i32, i32
  }
  func.func @transform_1(%arg0: i32, %arg1: i32, %arg2: i32) -> (i32, i32) {
    %c0_i32 = arith.constant 0 : i32
    return %arg1, %arg2 : i32, i32
  }
  func.func @transform_2(%arg0: i32, %arg1: i32, %arg2: i32) -> (i32, i32) {
    %c0_i32 = arith.constant 0 : i32
    return %arg0, %arg1 : i32, i32
  }
}

</mosaic_0001>

<llo_original>
// kernel: tpu_custom_call.1
$region0: #{tpu_custom_call.1}
  #allocation0 [shape = 'u32[]', space=smem, size = 0x4, offset = 0x4, fixed_abs, tag = 'smem constant byte address 0x4 - core index']
  #allocation1 [shape = 'u32[144,128]{1,0:T(1,128)}', space=vmem, size = 0x12000, scoped, tag = 'internal scratch']
  %s0 = inlined_call_operand.hbm [shape: f32[256,1536], index: 0, kind: input, shape index: {}]
  %s1 = inlined_call_operand.hbm [shape: f32[256,1536], index: 1, kind: input, shape index: {}]
  %s2 = inlined_call_operand.hbm [shape: f32[256,256], index: 2, kind: output, shape index: {}]
  %s3 = sld [smem:[#allocation0]]
  $region53: #{tpu_custom_call.1} parent=0
    _
  %s5 = ssub.s32 1, %s3
  %s6 = scalar_select 0, %s5, %s3
  $region1: #{tpu_custom_call.1} parent=0
    #allocation2 [shape = 'u8[524288]{0}', space=vmem, size = 0x80000, scoped, tag = 'input window, operand 0']
    #allocation3 [shape = 's32[2]{0}', space=sflag, size = 0x8, scoped, tag = 'scoped memory for tpu_custom_call.1']
    #allocation4 [shape = 's32[2]{0}', space=sflag, size = 0x8, scoped, tag = 'scoped memory for tpu_custom_call.1']
    #allocation5 [shape = 'u8[524288]{0}', space=vmem, size = 0x80000, scoped, tag = 'input window, operand 1']
    #allocation6 [shape = 's32[2]{0}', space=sflag, size = 0x8, scoped, tag = 'scoped memory for tpu_custom_call.1']
    #allocation7 [shape = 'u8[131072]{0}', space=vmem, size = 0x20000, scoped, tag = 'output window, operand 0']
    %7 = vsyncpa [#allocation3], 0
    %s8 = scalar_lea.sflag [#allocation3], 1
    %9 = vsyncpa %s8, 0
    %10 = vsyncpa [#allocation6], 0
    %s11 = scalar_lea.sflag [#allocation6], 1
    %12 = vsyncpa %s11, 0
    %13 = vsyncpa [#allocation4], 0
    %s14 = scalar_lea.sflag [#allocation4], 1
    %15 = vsyncpa %s14, 0
    loop: start=0, step=1, limit=14
    $region2: #{tpu_custom_call.1} parent=1 // loop_pre_header
      _
    $region3: #{tpu_custom_call.1} parent=1 // loop_header
      %s17 = sphi 0, %s21
      %p18 = scmp.ge.s32.totalorder %s17, 14
      %s24 = sphi 0, %s43
      %s25 = sphi 0, %s39
      %s26 = sphi 0, %s35
      %s27 = sphi 0, %s24
      %s28 = sphi 0, %s25
      %s29 = sphi 0, %s26
      %s30 = sphi 0, %s27
      %s31 = sphi 0, %s28
      %s32 = sphi 0, %s29
      %s48 = sphi 0, %s50
      %s51 = sphi 0, %s48
      %s52 = sphi 0, %s51
      %s68 = sphi 0, %s52
      %s76 = sphi 0, %s78
      %s79 = sphi 0, %s76
      %s80 = sphi 0, %s79
      %s96 = sphi 0, %s80
      %s104 = sphi 0, %s106
      %s107 = sphi 0, %s104
      %s108 = sphi 0, %s107
      %s124 = sphi 0, %s108
    $region4: #{tpu_custom_call.1} parent=1 // loop_header_branch
      %20 = sbr.rel (%p18) target = $region8
    $region5: #{tpu_custom_call.1} parent=1 // loop_body
      %s22 = ssub.s32 %s17, 1
      %s23 = ssub.s32 %s17, 2
      %s33 = sadd.s32 1, %s26
      %p34 = scmp.ge.s32.totalorder %s33, 3
      %s35 = scalar_select %p34, 0, %s33
      %s36 = sadd.s32 1, %s25
      %s37 = scalar_select %p34, %s36, %s25
      %p38 = scmp.ge.s32.totalorder %s37, 2
      %s39 = scalar_select %p38, 0, %s37
      %s40 = sadd.s32 1, %s24
      %s41 = scalar_select %p38, %s40, %s24
      %p42 = scmp.ge.s32.totalorder %s41, 2
      %s43 = scalar_select %p42, 0, %s41
      %s44 = ssub.s32 %s24, %s43
      %s45 = ssub.s32 %s26, %s35
      %s46 = sor.u32 %s44, %s45
      %p47 = scmp.eq.s32.totalorder %s46, 0
      %s49 = sadd.s32 %s48, 1
      %s50 = scalar_select %p47, %s48, %s49
      %p53 = pneg %p47
      %p54 = scmp.eq.s32.totalorder %s17, 11
      %p55 = por %p53, %p54
      %p56 = scmp.ne.s32.totalorder %s48, %s51
      %p57 = scmp.eq.s32.totalorder %s17, 0
      %p58 = por %p56, %p57
      %p59 = scmp.ne.s32.totalorder %s48, %s51
      %p60 = scmp.eq.s32.totalorder %s22, 11
      %p61 = por %p59, %p60
      %p62 = scmp.ne.s32.totalorder %s51, %s52
      %p63 = scmp.eq.s32.totalorder %s22, 0
      %p64 = por %p62, %p63
      %p65 = scmp.ne.s32.totalorder %s51, %s52
      %p66 = scmp.eq.s32.totalorder %s23, 11
      %p67 = por %p65, %p66
      %p69 = scmp.ne.s32.totalorder %s52, %s68
      %p70 = scmp.eq.s32.totalorder %s23, 0
      %p71 = por %p69, %p70
      %s72 = ssub.s32 %s25, %s39
      %s73 = ssub.s32 %s26, %s35
      %s74 = sor.u32 %s72, %s73
      %p75 = scmp.eq.s32.totalorder %s74, 0
      %s77 = sadd.s32 %s76, 1
      %s78 = scalar_select %p75, %s76, %s77
      %p81 = pneg %p75
      %p82 = scmp.eq.s32.totalorder %s17, 11
      %p83 = por %p81, %p82
      %p84 = scmp.ne.s32.totalorder %s76, %s79
      %p85 = scmp.eq.s32.totalorder %s17, 0
      %p86 = por %p84, %p85
      %p87 = scmp.ne.s32.totalorder %s76, %s79
      %p88 = scmp.eq.s32.totalorder %s22, 11
      %p89 = por %p87, %p88
      %p90 = scmp.ne.s32.totalorder %s79, %s80
      %p91 = scmp.eq.s32.totalorder %s22, 0
      %p92 = por %p90, %p91
      %p93 = scmp.ne.s32.totalorder %s79, %s80
      %p94 = scmp.eq.s32.totalorder %s23, 11
      %p95 = por %p93, %p94
      %p97 = scmp.ne.s32.totalorder %s80, %s96
      %p98 = scmp.eq.s32.totalorder %s23, 0
      %p99 = por %p97, %p98
      %s100 = ssub.s32 %s24, %s43
      %s101 = ssub.s32 %s25, %s39
      %s102 = sor.u32 %s100, %s101
      %p103 = scmp.eq.s32.totalorder %s102, 0
      %s105 = sadd.s32 %s104, 1
      %s106 = scalar_select %p103, %s104, %s105
      %p109 = pneg %p103
      %p110 = scmp.eq.s32.totalorder %s17, 11
      %p111 = por %p109, %p110
      %p112 = scmp.ne.s32.totalorder %s104, %s107
      %p113 = scmp.eq.s32.totalorder %s17, 0
      %p114 = por %p112, %p113
      %p115 = scmp.ne.s32.totalorder %s104, %s107
      %p116 = scmp.eq.s32.totalorder %s22, 11
      %p117 = por %p115, %p116
      %p118 = scmp.ne.s32.totalorder %s107, %s108
      %p119 = scmp.eq.s32.totalorder %s22, 0
      %p120 = por %p118, %p119
      %p121 = scmp.ne.s32.totalorder %s107, %s108
      %p122 = scmp.eq.s32.totalorder %s23, 11
      %p123 = por %p121, %p122
      %p125 = scmp.ne.s32.totalorder %s108, %s124
      %p126 = scmp.eq.s32.totalorder %s23, 0
      %p127 = por %p125, %p126
      %p128 = scmp.le.s32.totalorder 1, %s17
      %p129 = scmp.lt.s32.totalorder %s17, 13
      %p130 = pnand %p128, %p129
      %p131 = pneg %p130
      // Predicated region
      $region9: #{tpu_custom_call.1} parent=5 // pred_check
        _
      $region10: #{tpu_custom_call.1} parent=5 // pred_check_branch
        %133 = sbr.rel (%p130) target = $region12
      $region11: #{tpu_custom_call.1} parent=5 // pred_region
        %s134 = ssub.s32 %s17, 1
      $region12: #{tpu_custom_call.1} parent=5 // pred_fallthru
        _
      %p135 = scmp.lt.s32.totalorder %s17, 12
      // Predicated region
      $region13: #{tpu_custom_call.1} parent=5 // pred_check
        %p136 = pneg %p135
      $region14: #{tpu_custom_call.1} parent=5 // pred_check_branch
        %138 = sbr.rel (%p136) target = $region16
      $region15: #{tpu_custom_call.1} parent=5 // pred_region
        // Predicated region
        $region17: #{tpu_custom_call.1} parent=15 // pred_check
          %p139 = pneg %p58
        $region18: #{tpu_custom_call.1} parent=15 // pred_check_branch
          %141 = sbr.rel (%p139) target = $region20
        $region19: #{tpu_custom_call.1} parent=15 // pred_region
          %s142 = sand.u32 %s48, 1
          %s143 = scalar_lea.sflag [#allocation3], %s142
          %s144 = sand.u32 %s48, 1
          %s145 = smul.addr %s144, 512
          %s146 = scalar_lea.vmem [#allocation2], %s145
          %s147 = smul.u32 16, %s24
          %s148 = smul.u32 4, %s26
          %s150 = ssub.s32 8192, 8192
          %151 = vsyncadd %s143, %s150
          %s152 = smul.addr %s147, 12
          %s153 = sadd.s32 %s148, %s152
          %s154 = smul.addr %s153, 128
          %s155 = scalar_lea.hbm %s0, %s154
          %s156 = sshll.u32 %s146, 4
          %s157 = int_to_ptr.vmem [resolvable:$true] %s156
          %162 = dma.hbm_to_vmem [thread:$0]  %s155, 8192, %s157, %s143, 1536, 512, 32
        $region20: #{tpu_custom_call.1} parent=15 // pred_fallthru
          _
        // Predicated region
        $region21: #{tpu_custom_call.1} parent=15 // pred_check
          %p163 = pneg %p86
        $region22: #{tpu_custom_call.1} parent=15 // pred_check_branch
          %165 = sbr.rel (%p163) target = $region24
        $region23: #{tpu_custom_call.1} parent=15 // pred_region
          %s166 = sand.u32 %s76, 1
          %s167 = scalar_lea.sflag [#allocation6], %s166
          %s168 = sand.u32 %s76, 1
          %s169 = smul.addr %s168, 512
          %s170 = scalar_lea.vmem [#allocation5], %s169
          %s171 = smul.u32 16, %s25
          %s172 = smul.u32 4, %s26
          %s174 = ssub.s32 8192, 8192
          %175 = vsyncadd %s167, %s174
          %s176 = smul.addr %s171, 12
          %s177 = sadd.s32 %s172, %s176
          %s178 = smul.addr %s177, 128
          %s179 = scalar_lea.hbm %s1, %s178
          %s180 = sshll.u32 %s170, 4
          %s181 = int_to_ptr.vmem [resolvable:$true] %s180
          %186 = dma.hbm_to_vmem [thread:$0]  %s179, 8192, %s181, %s167, 1536, 512, 32
        $region24: #{tpu_custom_call.1} parent=15 // pred_fallthru
          _
      $region16: #{tpu_custom_call.1} parent=5 // pred_fallthru
        _
      %p187 = scmp.le.s32.totalorder 1, %s17
      %p188 = scmp.lt.s32.totalorder %s17, 13
      %p189 = pnand %p187, %p188
      %p190 = pneg %p189
      // Predicated region
      $region25: #{tpu_custom_call.1} parent=5 // pred_check
        _
      $region26: #{tpu_custom_call.1} parent=5 // pred_check_branch
        %192 = sbr.rel (%p189) target = $region28
      $region27: #{tpu_custom_call.1} parent=5 // pred_region
        %s193 = ssub.s32 %s17, 1
        %s194 = sand.u32 %s51, 1
        %s195 = scalar_lea.sflag [#allocation3], %s194
        %s196 = sand.u32 %s51, 1
        %s197 = smul.addr %s196, 512
        %s198 = scalar_lea.vmem [#allocation2], %s197
        // Predicated region
        $region29: #{tpu_custom_call.1} parent=27 // pred_check
          %p199 = pneg %p64
        $region30: #{tpu_custom_call.1} parent=27 // pred_check_branch
          %201 = sbr.rel (%p199) target = $region32
        $region31: #{tpu_custom_call.1} parent=27 // pred_region
          %202 = dma.done %s195, 8192
        $region32: #{tpu_custom_call.1} parent=27 // pred_fallthru
          _
        %s203 = sand.u32 %s79, 1
        %s204 = scalar_lea.sflag [#allocation6], %s203
        %s205 = sand.u32 %s79, 1
        %s206 = smul.addr %s205, 512
        %s207 = scalar_lea.vmem [#allocation5], %s206
        // Predicated region
        $region33: #{tpu_custom_call.1} parent=27 // pred_check
          %p208 = pneg %p92
        $region34: #{tpu_custom_call.1} parent=27 // pred_check_branch
          %210 = sbr.rel (%p208) target = $region36
        $region35: #{tpu_custom_call.1} parent=27 // pred_region
          %211 = dma.done %s204, 8192
        $region36: #{tpu_custom_call.1} parent=27 // pred_fallthru
          _
        %s212 = sand.u32 %s51, 1
        %s213 = scalar_lea.sflag [#allocation3], %s212
        %s214 = sand.u32 %s51, 1
        %s215 = smul.addr %s214, 512
        %s216 = scalar_lea.vmem [#allocation2], %s215
        %p217 = pneg %p64
        %p218 = pneg %p61
        %s219 = sand.u32 %s79, 1
        %s220 = scalar_lea.sflag [#allocation6], %s219
        %s221 = sand.u32 %s79, 1
        %s222 = smul.addr %s221, 512
        %s223 = scalar_lea.vmem [#allocation5], %s222
        %p224 = pneg %p92
        %p225 = pneg %p89
        %p226 = pneg %p120
        %p227 = pneg %p117
        %s228 = sand.u32 %s107, 1
        %s229 = scalar_lea.sflag [#allocation4], %s228
        %s230 = sand.u32 %s107, 1
        %s231 = smul.addr %s230, 128
        %s232 = scalar_lea.vmem [#allocation7], %s231
        %s233 = smul.u32 16, %s27
        %s234 = smul.u32 4, %s29
        %s235 = smul.u32 16, %s28
        %s236 = smul.u32 4, %s29
        %s237 = smul.u32 16, %s27
        %p238 = scmp.eq.s32.totalorder %s29, 0
        // Predicated region
        $region37: #{tpu_custom_call.1} parent=27 // pred_check
          %p239 = pneg %p238
        $region38: #{tpu_custom_call.1} parent=27 // pred_check_branch
          %241 = sbr.rel (%p239) target = $region40
        $region39: #{tpu_custom_call.1} parent=27 // pred_region
          %242 = vst [vmem:[%s232] sm:$0xff] 0.0
          %243 = vst [vmem:[%s232 + $0x8] sm:$0xff] 0.0
          %244 = vst [vmem:[%s232 + $0x10] sm:$0xff] 0.0
          %245 = vst [vmem:[%s232 + $0x18] sm:$0xff] 0.0
          %246 = vst [vmem:[%s232 + $0x20] sm:$0xff] 0.0
          %247 = vst [vmem:[%s232 + $0x28] sm:$0xff] 0.0
          %248 = vst [vmem:[%s232 + $0x30] sm:$0xff] 0.0
          %249 = vst [vmem:[%s232 + $0x38] sm:$0xff] 0.0
          %250 = vst [vmem:[%s232 + $0x40] sm:$0xff] 0.0
          %251 = vst [vmem:[%s232 + $0x48] sm:$0xff] 0.0
          %252 = vst [vmem:[%s232 + $0x50] sm:$0xff] 0.0
          %253 = vst [vmem:[%s232 + $0x58] sm:$0xff] 0.0
          %254 = vst [vmem:[%s232 + $0x60] sm:$0xff] 0.0
          %255 = vst [vmem:[%s232 + $0x68] sm:$0xff] 0.0
          %256 = vst [vmem:[%s232 + $0x70] sm:$0xff] 0.0
          %257 = vst [vmem:[%s232 + $0x78] sm:$0xff] 0.0
        $region40: #{tpu_custom_call.1} parent=27 // pred_fallthru
          _
        %v258 = vld [vmem:[%s232] sm:$0xff]
        %v259 = vld [vmem:[%s232 + $0x8] sm:$0xff]
        %v260 = vld [vmem:[%s232 + $0x10] sm:$0xff]
        %v261 = vld [vmem:[%s232 + $0x18] sm:$0xff]
        %v262 = vld [vmem:[%s232 + $0x20] sm:$0xff]
        %v263 = vld [vmem:[%s232 + $0x28] sm:$0xff]
        %v264 = vld [vmem:[%s232 + $0x30] sm:$0xff]
        %v265 = vld [vmem:[%s232 + $0x38] sm:$0xff]
        %v266 = vld [vmem:[%s232 + $0x40] sm:$0xff]
        %v267 = vld [vmem:[%s232 + $0x48] sm:$0xff]
        %v268 = vld [vmem:[%s232 + $0x50] sm:$0xff]
        %v269 = vld [vmem:[%s232 + $0x58] sm:$0xff]
        %v270 = vld [vmem:[%s232 + $0x60] sm:$0xff]
        %v271 = vld [vmem:[%s232 + $0x68] sm:$0xff]
        %v272 = vld [vmem:[%s232 + $0x70] sm:$0xff]
        %v273 = vld [vmem:[%s232 + $0x78] sm:$0xff]
        %v274 = vld [vmem:[%s198] sm:$0xff]
        %v275 = vld [vmem:[%s198 + $0x8] sm:$0xff]
        %v276 = vld [vmem:[%s198 + $0x10] sm:$0xff]
        %v277 = vld [vmem:[%s198 + $0x18] sm:$0xff]
        %v278 = vld [vmem:[%s198 + $0x20] sm:$0xff]
        %v279 = vld [vmem:[%s198 + $0x28] sm:$0xff]
        %v280 = vld [vmem:[%s198 + $0x30] sm:$0xff]
        %v281 = vld [vmem:[%s198 + $0x38] sm:$0xff]
        %v282 = vld [vmem:[%s198 + $0x40] sm:$0xff]
        %v283 = vld [vmem:[%s198 + $0x48] sm:$0xff]
        %v284 = vld [vmem:[%s198 + $0x50] sm:$0xff]
        %v285 = vld [vmem:[%s198 + $0x58] sm:$0xff]
        %v286 = vld [vmem:[%s198 + $0x60] sm:$0xff]
        %v287 = vld [vmem:[%s198 + $0x68] sm:$0xff]
        %v288 = vld [vmem:[%s198 + $0x70] sm:$0xff]
        %v289 = vld [vmem:[%s198 + $0x78] sm:$0xff]
        %v290 = vld [vmem:[%s198 + $0x80] sm:$0xff]
        %v291 = vld [vmem:[%s198 + $0x88] sm:$0xff]
        %v292 = vld [vmem:[%s198 + $0x90] sm:$0xff]
        %v293 = vld [vmem:[%s198 + $0x98] sm:$0xff]
        %v294 = vld [vmem:[%s198 + $0xa0] sm:$0xff]
        %v295 = vld [vmem:[%s198 + $0xa8] sm:$0xff]
        %v296 = vld [vmem:[%s198 + $0xb0] sm:$0xff]
        %v297 = vld [vmem:[%s198 + $0xb8] sm:$0xff]
        %v298 = vld [vmem:[%s198 + $0xc0] sm:$0xff]
        %v299 = vld [vmem:[%s198 + $0xc8] sm:$0xff]
        %v300 = vld [vmem:[%s198 + $0xd0] sm:$0xff]
        %v301 = vld [vmem:[%s198 + $0xd8] sm:$0xff]
        %v302 = vld [vmem:[%s198 + $0xe0] sm:$0xff]
        %v303 = vld [vmem:[%s198 + $0xe8] sm:$0xff]
        %v304 = vld [vmem:[%s198 + $0xf0] sm:$0xff]
        %v305 = vld [vmem:[%s198 + $0xf8] sm:$0xff]
        %v306 = vld [vmem:[%s198 + $0x100] sm:$0xff]
        %v307 = vld [vmem:[%s198 + $0x108] sm:$0xff]
        %v308 = vld [vmem:[%s198 + $0x110] sm:$0xff]
        %v309 = vld [vmem:[%s198 + $0x118] sm:$0xff]
        %v310 = vld [vmem:[%s198 + $0x120] sm:$0xff]
        %v311 = vld [vmem:[%s198 + $0x128] sm:$0xff]
        %v312 = vld [vmem:[%s198 + $0x130] sm:$0xff]
        %v313 = vld [vmem:[%s198 + $0x138] sm:$0xff]
        %v314 = vld [vmem:[%s198 + $0x140] sm:$0xff]
        %v315 = vld [vmem:[%s198 + $0x148] sm:$0xff]
        %v316 = vld [vmem:[%s198 + $0x150] sm:$0xff]
        %v317 = vld [vmem:[%s198 + $0x158] sm:$0xff]
        %v318 = vld [vmem:[%s198 + $0x160] sm:$0xff]
        %v319 = vld [vmem:[%s198 + $0x168] sm:$0xff]
        %v320 = vld [vmem:[%s198 + $0x170] sm:$0xff]
        %v321 = vld [vmem:[%s198 + $0x178] sm:$0xff]
        %v322 = vld [vmem:[%s198 + $0x180] sm:$0xff]
        %v323 = vld [vmem:[%s198 + $0x188] sm:$0xff]
        %v324 = vld [vmem:[%s198 + $0x190] sm:$0xff]
        %v325 = vld [vmem:[%s198 + $0x198] sm:$0xff]
        %v326 = vld [vmem:[%s198 + $0x1a0] sm:$0xff]
        %v327 = vld [vmem:[%s198 + $0x1a8] sm:$0xff]
        %v328 = vld [vmem:[%s198 + $0x1b0] sm:$0xff]
        %v329 = vld [vmem:[%s198 + $0x1b8] sm:$0xff]
        %v330 = vld [vmem:[%s198 + $0x1c0] sm:$0xff]
        %v331 = vld [vmem:[%s198 + $0x1c8] sm:$0xff]
        %v332 = vld [vmem:[%s198 + $0x1d0] sm:$0xff]
        %v333 = vld [vmem:[%s198 + $0x1d8] sm:$0xff]
        %v334 = vld [vmem:[%s198 + $0x1e0] sm:$0xff]
        %v335 = vld [vmem:[%s198 + $0x1e8] sm:$0xff]
        %v336 = vld [vmem:[%s198 + $0x1f0] sm:$0xff]
        %v337 = vld [vmem:[%s198 + $0x1f8] sm:$0xff]
        %v338 = vld [vmem:[%s207] sm:$0xff]
        %v339 = vld [vmem:[%s207 + $0x8] sm:$0xff]
        %v340 = vld [vmem:[%s207 + $0x10] sm:$0xff]
        %v341 = vld [vmem:[%s207 + $0x18] sm:$0xff]
        %v342 = vld [vmem:[%s207 + $0x20] sm:$0xff]
        %v343 = vld [vmem:[%s207 + $0x28] sm:$0xff]
        %v344 = vld [vmem:[%s207 + $0x30] sm:$0xff]
        %v345 = vld [vmem:[%s207 + $0x38] sm:$0xff]
        %v346 = vld [vmem:[%s207 + $0x40] sm:$0xff]
        %v347 = vld [vmem:[%s207 + $0x48] sm:$0xff]
        %v348 = vld [vmem:[%s207 + $0x50] sm:$0xff]
        %v349 = vld [vmem:[%s207 + $0x58] sm:$0xff]
        %v350 = vld [vmem:[%s207 + $0x60] sm:$0xff]
        %v351 = vld [vmem:[%s207 + $0x68] sm:$0xff]
        %v352 = vld [vmem:[%s207 + $0x70] sm:$0xff]
        %v353 = vld [vmem:[%s207 + $0x78] sm:$0xff]
        %v354 = vld [vmem:[%s207 + $0x80] sm:$0xff]
        %v355 = vld [vmem:[%s207 + $0x88] sm:$0xff]
        %v356 = vld [vmem:[%s207 + $0x90] sm:$0xff]
        %v357 = vld [vmem:[%s207 + $0x98] sm:$0xff]
        %v358 = vld [vmem:[%s207 + $0xa0] sm:$0xff]
        %v359 = vld [vmem:[%s207 + $0xa8] sm:$0xff]
        %v360 = vld [vmem:[%s207 + $0xb0] sm:$0xff]
        %v361 = vld [vmem:[%s207 + $0xb8] sm:$0xff]
        %v362 = vld [vmem:[%s207 + $0xc0] sm:$0xff]
        %v363 = vld [vmem:[%s207 + $0xc8] sm:$0xff]
        %v364 = vld [vmem:[%s207 + $0xd0] sm:$0xff]
        %v365 = vld [vmem:[%s207 + $0xd8] sm:$0xff]
        %v366 = vld [vmem:[%s207 + $0xe0] sm:$0xff]
        %v367 = vld [vmem:[%s207 + $0xe8] sm:$0xff]
        %v368 = vld [vmem:[%s207 + $0xf0] sm:$0xff]
        %v369 = vld [vmem:[%s207 + $0xf8] sm:$0xff]
        %v370 = vld [vmem:[%s207 + $0x100] sm:$0xff]
        %v371 = vld [vmem:[%s207 + $0x108] sm:$0xff]
        %v372 = vld [vmem:[%s207 + $0x110] sm:$0xff]
        %v373 = vld [vmem:[%s207 + $0x118] sm:$0xff]
        %v374 = vld [vmem:[%s207 + $0x120] sm:$0xff]
        %v375 = vld [vmem:[%s207 + $0x128] sm:$0xff]
        %v376 = vld [vmem:[%s207 + $0x130] sm:$0xff]
        %v377 = vld [vmem:[%s207 + $0x138] sm:$0xff]
        %v378 = vld [vmem:[%s207 + $0x140] sm:$0xff]
        %v379 = vld [vmem:[%s207 + $0x148] sm:$0xff]
        %v380 = vld [vmem:[%s207 + $0x150] sm:$0xff]
        %v381 = vld [vmem:[%s207 + $0x158] sm:$0xff]
        %v382 = vld [vmem:[%s207 + $0x160] sm:$0xff]
        %v383 = vld [vmem:[%s207 + $0x168] sm:$0xff]
        %v384 = vld [vmem:[%s207 + $0x170] sm:$0xff]
        %v385 = vld [vmem:[%s207 + $0x178] sm:$0xff]
        %v386 = vld [vmem:[%s207 + $0x180] sm:$0xff]
        %v387 = vld [vmem:[%s207 + $0x188] sm:$0xff]
        %v388 = vld [vmem:[%s207 + $0x190] sm:$0xff]
        %v389 = vld [vmem:[%s207 + $0x198] sm:$0xff]
        %v390 = vld [vmem:[%s207 + $0x1a0] sm:$0xff]
        %v391 = vld [vmem:[%s207 + $0x1a8] sm:$0xff]
        %v392 = vld [vmem:[%s207 + $0x1b0] sm:$0xff]
        %v393 = vld [vmem:[%s207 + $0x1b8] sm:$0xff]
        %v394 = vld [vmem:[%s207 + $0x1c0] sm:$0xff]
        %v395 = vld [vmem:[%s207 + $0x1c8] sm:$0xff]
        %v396 = vld [vmem:[%s207 + $0x1d0] sm:$0xff]
        %v397 = vld [vmem:[%s207 + $0x1d8] sm:$0xff]
        %v398 = vld [vmem:[%s207 + $0x1e0] sm:$0xff]
        %v399 = vld [vmem:[%s207 + $0x1e8] sm:$0xff]
        %v400 = vld [vmem:[%s207 + $0x1f0] sm:$0xff]
        %v401 = vld [vmem:[%s207 + $0x1f8] sm:$0xff]
        %402 = vmatprep.subr.mxu0 %v339
        %403 = vmatpush1.xpose.msra.mxu0 %v338
        %404 = vmatprep.subr.mxu0 %v343
        %405 = vmatpush1.xpose.msra.mxu0 %v342
        %406 = vmatprep.subr.mxu0 %v347
        %407 = vmatpush1.xpose.msra.mxu0 %v346
        %408 = vmatprep.subr.mxu0 %v351
        %409 = vmatpush1.xpose.msra.mxu0 %v350
        %410 = vmatprep.subr.mxu0 %v355
        %411 = vmatpush1.xpose.msra.mxu0 %v354
        %412 = vmatprep.subr.mxu0 %v359
        %413 = vmatpush1.xpose.msra.mxu0 %v358
        %414 = vmatprep.subr.mxu0 %v363
        %415 = vmatpush1.xpose.msra.mxu0 %v362
        %416 = vmatprep.subr.mxu0 %v367
        %417 = vmatpush1.xpose.msra.mxu0 %v366
        %418 = vmatprep.subr.mxu0 %v371
        %419 = vmatpush1.xpose.msra.mxu0 %v370
        %420 = vmatprep.subr.mxu0 %v375
        %421 = vmatpush1.xpose.msra.mxu0 %v374
        %422 = vmatprep.subr.mxu0 %v379
        %423 = vmatpush1.xpose.msra.mxu0 %v378
        %424 = vmatprep.subr.mxu0 %v383
        %425 = vmatpush1.xpose.msra.mxu0 %v382
        %426 = vmatprep.subr.mxu0 %v387
        %427 = vmatpush1.xpose.msra.mxu0 %v386
        %428 = vmatprep.subr.mxu0 %v391
        %429 = vmatpush1.xpose.msra.mxu0 %v390
        %430 = vmatprep.subr.mxu0 %v395
        %431 = vmatpush1.xpose.msra.mxu0 %v394
        %432 = vmatprep.subr.mxu0 %v399
        %433 = vmatpush1.xpose.msra.mxu0 %v398
        %434 = vmatprep.subr.mxu0 0.0
        %435 = vmatpush1.xpose.msra.mxu0 0.0
        %436 = vmatprep.subr.mxu0 0.0
        %437 = vmatpush1.xpose.msra.mxu0 0.0
        %438 = vmatprep.subr.mxu0 0.0
        %439 = vmatpush1.xpose.msra.mxu0 0.0
        %440 = vmatprep.subr.mxu0 0.0
        %441 = vmatpush1.xpose.msra.mxu0 0.0
        %442 = vmatprep.subr.mxu0 0.0
        %443 = vmatpush1.xpose.msra.mxu0 0.0
        %444 = vmatprep.subr.mxu0 0.0
        %445 = vmatpush1.xpose.msra.mxu0 0.0
        %446 = vmatprep.subr.mxu0 0.0
        %447 = vmatpush1.xpose.msra.mxu0 0.0
        %448 = vmatprep.subr.mxu0 0.0
        %449 = vmatpush1.xpose.msra.mxu0 0.0
        %450 = vmatprep.subr.mxu0 0.0
        %451 = vmatpush1.xpose.msra.mxu0 0.0
        %452 = vmatprep.subr.mxu0 0.0
        %453 = vmatpush1.xpose.msra.mxu0 0.0
        %454 = vmatprep.subr.mxu0 0.0
        %455 = vmatpush1.xpose.msra.mxu0 0.0
        %456 = vmatprep.subr.mxu0 0.0
        %457 = vmatpush1.xpose.msra.mxu0 0.0
        %458 = vmatprep.subr.mxu0 0.0
        %459 = vmatpush1.xpose.msra.mxu0 0.0
        %460 = vmatprep.subr.mxu0 0.0
        %461 = vmatpush1.xpose.msra.mxu0 0.0
        %462 = vmatprep.subr.mxu0 0.0
        %463 = vmatpush1.xpose.msra.mxu0 0.0
        %464 = vmatprep.subr.mxu0 0.0
        %465 = vmatpush1.xpose.msra.mxu0 0.0
        %466 = vmatprep.mubr.f32.mxu0 %v275
        %467 = vmatmul.mubr.f32.gmra.mrb[0].mxu0 %v274
        %v468 = vpop.f32.mrb[0].mxu0
        %v469 = vadd.f32 0.0, %v468
        %v470 = vpop.f32.mrb[0].mxu0
        %471 = vmatprep.mubr.f32.mxu0 %v279
        %472 = vmatmul.mubr.f32.gmra.mrb[0].mxu0 %v278
        %v473 = vpop.f32.mrb[0].mxu0
        %v474 = vadd.f32 0.0, %v473
        %v475 = vpop.f32.mrb[0].mxu0
        %476 = vmatprep.mubr.f32.mxu0 %v283
        %477 = vmatmul.mubr.f32.gmra.mrb[0].mxu0 %v282
        %v478 = vpop.f32.mrb[0].mxu0
        %v479 = vadd.f32 0.0, %v478
        %v480 = vpop.f32.mrb[0].mxu0
        %481 = vmatprep.mubr.f32.mxu0 %v287
        %482 = vmatmul.mubr.f32.gmra.mrb[0].mxu0 %v286
        %v483 = vpop.f32.mrb[0].mxu0
        %v484 = vadd.f32 0.0, %v483
        %v485 = vpop.f32.mrb[0].mxu0
        %486 = vmatprep.mubr.f32.mxu0 %v291
        %487 = vmatmul.mubr.f32.gmra.mrb[0].mxu0 %v290
        %v488 = vpop.f32.mrb[0].mxu0
        %v489 = vadd.f32 0.0, %v488
        %v490 = vpop.f32.mrb[0].mxu0
        %491 = vmatprep.mubr.f32.mxu0 %v295
        %492 = vmatmul.mubr.f32.gmra.mrb[0].mxu0 %v294
        %v493 = vpop.f32.mrb[0].mxu0
        %v494 = vadd.f32 0.0, %v493
        %v495 = vpop.f32.mrb[0].mxu0
        %496 = vmatprep.mubr.f32.mxu0 %v299
        %497 = vmatmul.mubr.f32.gmra.mrb[0].mxu0 %v298
        %v498 = vpop.f32.mrb[0].mxu0
        %v499 = vadd.f32 0.0, %v498
        %v500 = vpop.f32.mrb[0].mxu0
        %501 = vmatprep.mubr.f32.mxu0 %v303
        %502 = vmatmul.mubr.f32.gmra.mrb[0].mxu0 %v302
        %v503 = vpop.f32.mrb[0].mxu0
        %v504 = vadd.f32 0.0, %v503
        %v505 = vpop.f32.mrb[0].mxu0
        %506 = vmatprep.mubr.f32.mxu0 %v307
        %507 = vmatmul.mubr.f32.gmra.mrb[0].mxu0 %v306
        %v508 = vpop.f32.mrb[0].mxu0
        %v509 = vadd.f32 0.0, %v508
        %v510 = vpop.f32.mrb[0].mxu0
        %511 = vmatprep.mubr.f32.mxu0 %v311
        %512 = vmatmul.mubr.f32.gmra.mrb[0].mxu0 %v310
        %v513 = vpop.f32.mrb[0].mxu0
        %v514 = vadd.f32 0.0, %v513
        %v515 = vpop.f32.mrb[0].mxu0
        %516 = vmatprep.mubr.f32.mxu0 %v315
        %517 = vmatmul.mubr.f32.gmra.mrb[0].mxu0 %v314
        %v518 = vpop.f32.mrb[0].mxu0
        %v519 = vadd.f32 0.0, %v518
        %v520 = vpop.f32.mrb[0].mxu0
        %521 = vmatprep.mubr.f32.mxu0 %v319
        %522 = vmatmul.mubr.f32.gmra.mrb[0].mxu0 %v318
        %v523 = vpop.f32.mrb[0].mxu0
        %v524 = vadd.f32 0.0, %v523
        %v525 = vpop.f32.mrb[0].mxu0
        %526 = vmatprep.mubr.f32.mxu0 %v323
        %527 = vmatmul.mubr.f32.gmra.mrb[0].mxu0 %v322
        %v528 = vpop.f32.mrb[0].mxu0
        %v529 = vadd.f32 0.0, %v528
        %v530 = vpop.f32.mrb[0].mxu0
        %531 = vmatprep.mubr.f32.mxu0 %v327
        %532 = vmatmul.mubr.f32.gmra.mrb[0].mxu0 %v326
        %v533 = vpop.f32.mrb[0].mxu0
        %v534 = vadd.f32 0.0, %v533
        %v535 = vpop.f32.mrb[0].mxu0
        %536 = vmatprep.mubr.f32.mxu0 %v331
        %537 = vmatmul.mubr.f32.gmra.mrb[0].mxu0 %v330
        %v538 = vpop.f32.mrb[0].mxu0
        %v539 = vadd.f32 0.0, %v538
        %v540 = vpop.f32.mrb[0].mxu0
        %541 = vmatprep.mubr.f32.mxu0 %v335
        %542 = vmatmul.mubr.f32.gmra.mrb[0].mxu0 %v334
        %v543 = vpop.f32.mrb[0].mxu0
        %v544 = vadd.f32 0.0, %v543
        %v545 = vpop.f32.mrb[0].mxu0
        %546 = vdwg.mxu0
        %547 = vmatprep.subr.mxu0 %v341
        %548 = vmatpush1.xpose.msra.mxu0 %v340
        %549 = vmatprep.subr.mxu0 %v345
        %550 = vmatpush1.xpose.msra.mxu0 %v344
        %551 = vmatprep.subr.mxu0 %v349
        %552 = vmatpush1.xpose.msra.mxu0 %v348
        %553 = vmatprep.subr.mxu0 %v353
        %554 = vmatpush1.xpose.msra.mxu0 %v352
        %555 = vmatprep.subr.mxu0 %v357
        %556 = vmatpush1.xpose.msra.mxu0 %v356
        %557 = vmatprep.subr.mxu0 %v361
        %558 = vmatpush1.xpose.msra.mxu0 %v360
        %559 = vmatprep.subr.mxu0 %v365
        %560 = vmatpush1.xpose.msra.mxu0 %v364
        %561 = vmatprep.subr.mxu0 %v369
        %562 = vmatpush1.xpose.msra.mxu0 %v368
        %563 = vmatprep.subr.mxu0 %v373
        %564 = vmatpush1.xpose.msra.mxu0 %v372
        %565 = vmatprep.subr.mxu0 %v377
        %566 = vmatpush1.xpose.msra.mxu0 %v376
        %567 = vmatprep.subr.mxu0 %v381
        %568 = vmatpush1.xpose.msra.mxu0 %v380
        %569 = vmatprep.subr.mxu0 %v385
        %570 = vmatpush1.xpose.msra.mxu0 %v384
        %571 = vmatprep.subr.mxu0 %v389
        %572 = vmatpush1.xpose.msra.mxu0 %v388
        %573 = vmatprep.subr.mxu0 %v393
        %574 = vmatpush1.xpose.msra.mxu0 %v392
        %575 = vmatprep.subr.mxu0 %v397
        %576 = vmatpush1.xpose.msra.mxu0 %v396
        %577 = vmatprep.subr.mxu0 %v401
        %578 = vmatpush1.xpose.msra.mxu0 %v400
        %579 = vmatprep.subr.mxu0 0.0
        %580 = vmatpush1.xpose.msra.mxu0 0.0
        %581 = vmatprep.subr.mxu0 0.0
        %582 = vmatpush1.xpose.msra.mxu0 0.0
        %583 = vmatprep.subr.mxu0 0.0
        %584 = vmatpush1.xpose.msra.mxu0 0.0
        %585 = vmatprep.subr.mxu0 0.0
        %586 = vmatpush1.xpose.msra.mxu0 0.0
        %587 = vmatprep.subr.mxu0 0.0
        %588 = vmatpush1.xpose.msra.mxu0 0.0
        %589 = vmatprep.subr.mxu0 0.0
        %590 = vmatpush1.xpose.msra.mxu0 0.0
        %591 = vmatprep.subr.mxu0 0.0
        %592 = vmatpush1.xpose.msra.mxu0 0.0
        %593 = vmatprep.subr.mxu0 0.0
        %594 = vmatpush1.xpose.msra.mxu0 0.0
        %595 = vmatprep.subr.mxu0 0.0
        %596 = vmatpush1.xpose.msra.mxu0 0.0
        %597 = vmatprep.subr.mxu0 0.0
        %598 = vmatpush1.xpose.msra.mxu0 0.0
        %599 = vmatprep.subr.mxu0 0.0
        %600 = vmatpush1.xpose.msra.mxu0 0.0
        %601 = vmatprep.subr.mxu0 0.0
        %602 = vmatpush1.xpose.msra.mxu0 0.0
        %603 = vmatprep.subr.mxu0 0.0
        %604 = vmatpush1.xpose.msra.mxu0 0.0
        %605 = vmatprep.subr.mxu0 0.0
        %606 = vmatpush1.xpose.msra.mxu0 0.0
        %607 = vmatprep.subr.mxu0 0.0
        %608 = vmatpush1.xpose.msra.mxu0 0.0
        %609 = vmatprep.subr.mxu0 0.0
        %610 = vmatpush1.xpose.msra.mxu0 0.0
        %611 = vmatprep.mubr.f32.mxu0 %v277
        %612 = vmatmul.mubr.f32.gmra.mrb[0].mxu0 %v276
        %v613 = vpop.f32.mrb[0].mxu0
        %v614 = vadd.f32 %v469, %v613
        %v615 = vpop.f32.mrb[0].mxu0
        %616 = vmatprep.mubr.f32.mxu0 %v281
        %617 = vmatmul.mubr.f32.gmra.mrb[0].mxu0 %v280
        %v618 = vpop.f32.mrb[0].mxu0
        %v619 = vadd.f32 %v474, %v618
        %v620 = vpop.f32.mrb[0].mxu0
        %621 = vmatprep.mubr.f32.mxu0 %v285
        %622 = vmatmul.mubr.f32.gmra.mrb[0].mxu0 %v284
        %v623 = vpop.f32.mrb[0].mxu0
        %v624 = vadd.f32 %v479, %v623
        %v625 = vpop.f32.mrb[0].mxu0
        %626 = vmatprep.mubr.f32.mxu0 %v289
        %627 = vmatmul.mubr.f32.gmra.mrb[0].mxu0 %v288
        %v628 = vpop.f32.mrb[0].mxu0
        %v629 = vadd.f32 %v484, %v628
        %v630 = vpop.f32.mrb[0].mxu0
        %631 = vmatprep.mubr.f32.mxu0 %v293
        %632 = vmatmul.mubr.f32.gmra.mrb[0].mxu0 %v292
        %v633 = vpop.f32.mrb[0].mxu0
        %v634 = vadd.f32 %v489, %v633
        %v635 = vpop.f32.mrb[0].mxu0
        %636 = vmatprep.mubr.f32.mxu0 %v297
        %637 = vmatmul.mubr.f32.gmra.mrb[0].mxu0 %v296
        %v638 = vpop.f32.mrb[0].mxu0
        %v639 = vadd.f32 %v494, %v638
        %v640 = vpop.f32.mrb[0].mxu0
        %641 = vmatprep.mubr.f32.mxu0 %v301
        %642 = vmatmul.mubr.f32.gmra.mrb[0].mxu0 %v300
        %v643 = vpop.f32.mrb[0].mxu0
        %v644 = vadd.f32 %v499, %v643
        %v645 = vpop.f32.mrb[0].mxu0
        %646 = vmatprep.mubr.f32.mxu0 %v305
        %647 = vmatmul.mubr.f32.gmra.mrb[0].mxu0 %v304
        %v648 = vpop.f32.mrb[0].mxu0
        %v649 = vadd.f32 %v504, %v648
        %v650 = vpop.f32.mrb[0].mxu0
        %651 = vmatprep.mubr.f32.mxu0 %v309
        %652 = vmatmul.mubr.f32.gmra.mrb[0].mxu0 %v308
        %v653 = vpop.f32.mrb[0].mxu0
        %v654 = vadd.f32 %v509, %v653
        %v655 = vpop.f32.mrb[0].mxu0
        %656 = vmatprep.mubr.f32.mxu0 %v313
        %657 = vmatmul.mubr.f32.gmra.mrb[0].mxu0 %v312
        %v658 = vpop.f32.mrb[0].mxu0
        %v659 = vadd.f32 %v514, %v658
        %v660 = vpop.f32.mrb[0].mxu0
        %661 = vmatprep.mubr.f32.mxu0 %v317
        %662 = vmatmul.mubr.f32.gmra.mrb[0].mxu0 %v316
        %v663 = vpop.f32.mrb[0].mxu0
        %v664 = vadd.f32 %v519, %v663
        %v665 = vpop.f32.mrb[0].mxu0
        %666 = vmatprep.mubr.f32.mxu0 %v321
        %667 = vmatmul.mubr.f32.gmra.mrb[0].mxu0 %v320
        %v668 = vpop.f32.mrb[0].mxu0
        %v669 = vadd.f32 %v524, %v668
        %v670 = vpop.f32.mrb[0].mxu0
        %671 = vmatprep.mubr.f32.mxu0 %v325
        %672 = vmatmul.mubr.f32.gmra.mrb[0].mxu0 %v324
        %v673 = vpop.f32.mrb[0].mxu0
        %v674 = vadd.f32 %v529, %v673
        %v675 = vpop.f32.mrb[0].mxu0
        %676 = vmatprep.mubr.f32.mxu0 %v329
        %677 = vmatmul.mubr.f32.gmra.mrb[0].mxu0 %v328
        %v678 = vpop.f32.mrb[0].mxu0
        %v679 = vadd.f32 %v534, %v678
        %v680 = vpop.f32.mrb[0].mxu0
        %681 = vmatprep.mubr.f32.mxu0 %v333
        %682 = vmatmul.mubr.f32.gmra.mrb[0].mxu0 %v332
        %v683 = vpop.f32.mrb[0].mxu0
        %v684 = vadd.f32 %v539, %v683
        %v685 = vpop.f32.mrb[0].mxu0
        %686 = vmatprep.mubr.f32.mxu0 %v337
        %687 = vmatmul.mubr.f32.gmra.mrb[0].mxu0 %v336
        %v688 = vpop.f32.mrb[0].mxu0
        %v689 = vadd.f32 %v544, %v688
        %v690 = vpop.f32.mrb[0].mxu0
        %691 = vdwg.mxu0
        %v692 = vadd.f32 %v258, %v614
        %v693 = vadd.f32 %v259, %v619
        %v694 = vadd.f32 %v260, %v624
        %v695 = vadd.f32 %v261, %v629
        %v696 = vadd.f32 %v262, %v634
        %v697 = vadd.f32 %v263, %v639
        %v698 = vadd.f32 %v264, %v644
        %v699 = vadd.f32 %v265, %v649
        %v700 = vadd.f32 %v266, %v654
        %v701 = vadd.f32 %v267, %v659
        %v702 = vadd.f32 %v268, %v664
        %v703 = vadd.f32 %v269, %v669
        %v704 = vadd.f32 %v270, %v674
        %v705 = vadd.f32 %v271, %v679
        %v706 = vadd.f32 %v272, %v684
        %v707 = vadd.f32 %v273, %v689
        %708 = vst [vmem:[%s232] sm:$0xff] %v692
        %709 = vst [vmem:[%s232 + $0x8] sm:$0xff] %v693
        %710 = vst [vmem:[%s232 + $0x10] sm:$0xff] %v694
        %711 = vst [vmem:[%s232 + $0x18] sm:$0xff] %v695
        %712 = vst [vmem:[%s232 + $0x20] sm:$0xff] %v696
        %713 = vst [vmem:[%s232 + $0x28] sm:$0xff] %v697
        %714 = vst [vmem:[%s232 + $0x30] sm:$0xff] %v698
        %715 = vst [vmem:[%s232 + $0x38] sm:$0xff] %v699
        %716 = vst [vmem:[%s232 + $0x40] sm:$0xff] %v700
        %717 = vst [vmem:[%s232 + $0x48] sm:$0xff] %v701
        %718 = vst [vmem:[%s232 + $0x50] sm:$0xff] %v702
        %719 = vst [vmem:[%s232 + $0x58] sm:$0xff] %v703
        %720 = vst [vmem:[%s232 + $0x60] sm:$0xff] %v704
        %721 = vst [vmem:[%s232 + $0x68] sm:$0xff] %v705
        %722 = vst [vmem:[%s232 + $0x70] sm:$0xff] %v706
        %723 = vst [vmem:[%s232 + $0x78] sm:$0xff] %v707
        %s724 = sand.u32 %s107, 1
        %s725 = scalar_lea.sflag [#allocation4], %s724
        %s726 = sand.u32 %s107, 1
        %s727 = smul.addr %s726, 128
        %s728 = scalar_lea.vmem [#allocation7], %s727
        // Predicated region
        $region41: #{tpu_custom_call.1} parent=27 // pred_check
          %p729 = pneg %p117
        $region42: #{tpu_custom_call.1} parent=27 // pred_check_branch
          %731 = sbr.rel (%p729) target = $region44
        $region43: #{tpu_custom_call.1} parent=27 // pred_region
          %s732 = smul.u32 16, %s27
          %s734 = ssub.s32 2048, 2048
          %735 = vsyncadd %s725, %s734
          %s736 = smul.addr %s732, 2
          %s737 = sadd.s32 %s28, %s736
          %s738 = smul.addr %s737, 128
          %s739 = scalar_lea.hbm %s2, %s738
          %s740 = sshll.u32 %s728, 4
          %s741 = int_to_ptr.vmem [resolvable:$true] %s740
          %746 = dma.vmem_to_hbm [thread:$0]  %s741, 2048, %s739, %s725, 128, 256, 8
        $region44: #{tpu_custom_call.1} parent=27 // pred_fallthru
          _
      $region28: #{tpu_custom_call.1} parent=5 // pred_fallthru
        _
      %p747 = scmp.le.s32.totalorder 2, %s17
      // Predicated region
      $region45: #{tpu_custom_call.1} parent=5 // pred_check
        %p748 = pneg %p747
      $region46: #{tpu_custom_call.1} parent=5 // pred_check_branch
        %750 = sbr.rel (%p748) target = $region48
      $region47: #{tpu_custom_call.1} parent=5 // pred_region
        %s751 = ssub.s32 %s17, 2
        // Predicated region
        $region49: #{tpu_custom_call.1} parent=47 // pred_check
          %p752 = pneg %p123
        $region50: #{tpu_custom_call.1} parent=47 // pred_check_branch
          %754 = sbr.rel (%p752) target = $region52
        $region51: #{tpu_custom_call.1} parent=47 // pred_region
          %s755 = sand.u32 %s108, 1
          %s756 = scalar_lea.sflag [#allocation4], %s755
          %s757 = sand.u32 %s108, 1
          %s758 = smul.addr %s757, 128
          %s759 = scalar_lea.vmem [#allocation7], %s758
          %760 = dma.done %s756, 2048
        $region52: #{tpu_custom_call.1} parent=47 // pred_fallthru
          _
      $region48: #{tpu_custom_call.1} parent=5 // pred_fallthru
        _
    $region6: #{tpu_custom_call.1} parent=1 // loop_footer
      %s21 = sadd.s32 1, %s17
    $region7: #{tpu_custom_call.1} parent=1 // loop_footer_branch
      %16 = sbr.rel target = $region3
    $region8: #{tpu_custom_call.1} parent=1 // loop_exit
      _
    %761 = vsyncpa [#allocation3], 1
    %s762 = scalar_lea.sflag [#allocation3], 1
    %763 = vsyncpa %s762, 1
    %764 = vsyncpa [#allocation6], 1
    %s765 = scalar_lea.sflag [#allocation6], 1
    %766 = vsyncpa %s765, 1
    %767 = vsyncpa [#allocation4], 1
    %s768 = scalar_lea.sflag [#allocation4], 1
    %769 = vsyncpa %s768, 1

</llo_original>
